<compile_context>
chip_gen: v6e
topology: v6e:2x2x1
jax: 0.10.0
libtpu: 0.0.40
codegen_flags: <defaults>
</compile_context>

<pallas_src>
import functools
import math

import jax
import jax.numpy as jnp
from jax import lax
from jax.experimental import pallas as pl
from jax.experimental.pallas import tpu as pltpu

_MiB = 1024 * 1024


# ----------------------------------------------------------------------------
# PositionalEncoding buffer (deterministic re-implementation of the torch code).
# ----------------------------------------------------------------------------
def make_pe_buffer(d_model: int, max_len: int = 5000, dtype=jnp.float32):
    position = jnp.arange(max_len, dtype=jnp.float32)[:, None]            # [max_len, 1]
    div_term = jnp.exp(
        jnp.arange(0, d_model, 2, dtype=jnp.float32) * (-math.log(10000.0) / d_model)
    )                                                                     # [d_model/2]
    pe = jnp.zeros((max_len, 1, d_model), dtype=jnp.float32)
    pe = pe.at[:, 0, 0::2].set(jnp.sin(position * div_term))
    pe = pe.at[:, 0, 1::2].set(jnp.cos(position * div_term))
    return pe.astype(dtype)                                               # [max_len, 1, d_model]


# ----------------------------------------------------------------------------
# Stateless per-element hash for dropout (VPU only -- no pltpu.prng_*).
# ----------------------------------------------------------------------------
def _to_i32(v: int) -> int:
    """Python int -> two's-complement int32 value (for jnp int32 constants)."""
    v &= 0xFFFFFFFF
    return v - (1 << 32) if v >= (1 << 31) else v


_FMIX_C1 = _to_i32(0x85EBCA6B)
_FMIX_C2 = _to_i32(0xC2B2AE35)


def _srl32(h, k: int):
    """Logical right shift on int32: arithmetic shift + mask of sign-extended bits."""
    return (h >> k) & ((1 << (32 - k)) - 1)


def _fmix32(h):
    """murmur3 finalizer: full-avalanche mixer; int32 mul/xor/shift lower everywhere."""
    h = h ^ _srl32(h, 16)
    h = h * _FMIX_C1
    h = h ^ _srl32(h, 13)
    h = h * _FMIX_C2
    h = h ^ _srl32(h, 16)
    return h


def _dropout_mask_scaled(y, gid, seed, dropout_p):
    """Inverted dropout: keep iff 31 hashed bits >= round(p * 2^31); scale by 1/(1-p).

    Hash input is the GLOBAL flat element id, so the mask is independent of the
    tiling and distinct tiles never share a stream (review correctness concern).
    Scale is applied in f32; cast happens only at the final store.
    """
    bits = _fmix32(gid ^ seed) & jnp.int32(0x7FFFFFFF)          # 31 uniform bits
    thresh = jnp.int32(min(int(round(dropout_p * (1 << 31))), (1 << 31) - 1))
    inv_keep = jnp.float32(1.0 / (1.0 - dropout_p))
    return jnp.where(bits >= thresh, y * inv_keep, 0.0)


# ----------------------------------------------------------------------------
# Kernels.
# ----------------------------------------------------------------------------
def _pe_add_kernel(seed_ref, x_ref, pe_ref, o_ref, *, batch, d_model, row_stride,
                   seq_tile, dropout_p, train):
    """out[:, b*D:(b+1)*D] = dropout(x[:, b*D:(b+1)*D] + pe) for each batch b.

    x_ref/o_ref: (ts, B*D) lane-dense tiles; pe_ref: (ts, D) tile whose vregs are
    reused for every batch slice (no jnp.tile broadcast temp).  Compute is f32.
    """
    pe = pe_ref[...].astype(jnp.float32)                                   # (ts, D)
    do_dropout = train and dropout_p > 0.0
    if do_dropout:
        seed = seed_ref[0]
        rows = pl.program_id(0) * seq_tile + lax.broadcasted_iota(
            jnp.int32, (seq_tile, d_model), 0)                             # global seq rows
        cols = lax.broadcasted_iota(jnp.int32, (seq_tile, d_model), 1)
    # Static unroll over batch is fine for this model's small batches.
    # TODO(synk): use a (seq, batch-chunk) grid for large batch*d_model.
    for b in range(batch):
        sl = slice(b * d_model, (b + 1) * d_model)
        y = x_ref[:, sl].astype(jnp.float32) + pe                          # (ts, D), f32
        if do_dropout:
            gid = rows * row_stride + (b * d_model) + cols                 # unique flat id
            y = _dropout_mask_scaled(y, gid, seed, dropout_p)
        o_ref[:, sl] = y.astype(o_ref.dtype)


def _embed_pe_kernel(seed_ref, idx_ref, emb_ref, pe_ref, o_ref, *, batch, d_model,
                     vocab, row_stride, seq_tile, dropout_p, train):
    """Fused inputEmb -> posEnc: out[:, b*D:(b+1)*D] = dropout(emb[idx[:, b]] + pe).

    The embedding gather is a one-hot (ts, V) x (V, D) MXU matmul (gather-free,
    lowers on every backend); the embedding table stays VMEM-resident across the
    whole grid.  Removes the HBM read of the embedded activations entirely.
    """
    pe = pe_ref[...].astype(jnp.float32)                                   # (ts, D)
    emb = emb_ref[...].astype(jnp.float32)                                 # (V, D) resident
    vocab_iota = lax.broadcasted_iota(jnp.int32, (seq_tile, vocab), 1)
    do_dropout = train and dropout_p > 0.0
    if do_dropout:
        seed = seed_ref[0]
        rows = pl.program_id(0) * seq_tile + lax.broadcasted_iota(
            jnp.int32, (seq_tile, d_model), 0)
        cols = lax.broadcasted_iota(jnp.int32, (seq_tile, d_model), 1)
    for b in range(batch):
        onehot = (vocab_iota == idx_ref[:, b:b + 1]).astype(jnp.float32)   # (ts, V)
        y = jnp.dot(onehot, emb, preferred_element_type=jnp.float32,
                    precision=lax.Precision.HIGHEST) + pe                  # (ts, D)
        if do_dropout:
            gid = rows * row_stride + (b * d_model) + cols
            y = _dropout_mask_scaled(y, gid, seed, dropout_p)
        o_ref[:, b * d_model:(b + 1) * d_model] = y.astype(o_ref.dtype)


# ----------------------------------------------------------------------------
# Tiling / VMEM / core-parallel helpers.
# ----------------------------------------------------------------------------
def _vmem_budget_and_limit():
    """Per-generation VMEM tile budget and scoped-VMEM limit."""
    cap = 64 * _MiB                               # conservative (v7x-sized) fallback
    try:
        if jax.default_backend() == "tpu":
            cap = int(getattr(pltpu.get_tpu_info(), "vmem_capacity_bytes", cap))
    except Exception:
        pass                                      # non-TPU / interpret: keep fallback
    budget = min(24 * _MiB, cap // 4)             # ~16 MiB on v7x, 24 MiB on v5e/v6e
    limit = min(48 * _MiB, (cap * 9) // 16)       # ~36 MiB on v7x, 48 MiB on v5e/v6e
    return budget, limit


def _seq_dimension_semantics():
    """CORE_PARALLEL on v7x (2 TCs/chip: plain 'parallel' does not shard across
    them); 'parallel' on single-TC chips and non-TPU backends."""
    try:
        dev = jax.devices()[0]
        if dev.platform == "tpu":
            kind = dev.device_kind.lower().replace(" ", "")
            if ("v7" in kind or "tpu7" in kind) and hasattr(pltpu, "CORE_PARALLEL"):
                return pltpu.CORE_PARALLEL
    except Exception:
        pass
    return "parallel"


def _sublane_granule(itemsize: int) -> int:
    """Seq-tile granule: 8 rows for 4-byte dtypes, 16 for bf16, 32 for int8/fp8."""
    return max(8, 32 // int(itemsize))


def _auto_seq_tile(S, B, D, itemsize, *, train, budget_bytes, granule):
    """Largest granule-multiple seq tile whose double-buffered x/out/pe tiles plus
    train-mode per-slice temporaries fit the budget."""
    dma_row = 2 * (2 * B * D * itemsize + 4 * D)      # x + out tiles (+ f32 pe), x2 buffers
    tmp_row = 4 * D * (6 if train else 3)             # per-batch-slice f32/int32 temps
    ts = int(budget_bytes) // (dma_row + tmp_row)
    if ts >= S:
        return S
    return max(granule, (ts // granule) * granule)


def _check_tile_fits(tile_dma_bytes, vmem_limit):
    if tile_dma_bytes > vmem_limit:
        raise ValueError(
            f"double-buffered tile ({tile_dma_bytes / _MiB:.1f} MiB) exceeds the VMEM "
            f"limit ({vmem_limit / _MiB:.1f} MiB): batch*d_model is too large for a "
            "seq-only split")  # TODO(synk): add a lane-axis (batch-chunk) grid split.


# ----------------------------------------------------------------------------
# Wrappers.
# ----------------------------------------------------------------------------
def positional_encoding_forward(x, pe_buffer, *, dropout_p: float = 0.1,
                                train: bool = False, seed: int = 0,
                                ts: int | None = None, donate_x: bool = False):
    """PositionalEncoding.forward: dropout(x + pe[:seq_len]); x is [S, B, D]."""
    S, B, D = x.shape
    max_len = pe_buffer.shape[0]
    assert S <= max_len, f"seq_len={S} exceeds pe table max_len={max_len}"
    if train:
        assert 0.0 <= dropout_p < 1.0, "dropout_p must be in [0, 1) in training mode"
    assert S * B * D < 2 ** 31, "int32 element ids overflow"  # TODO(synk): 64-bit ids

    out_dtype = x.dtype
    itemsize = jnp.dtype(out_dtype).itemsize
    granule = _sublane_granule(itemsize)
    budget, vmem_limit = _vmem_budget_and_limit()

    if ts is None:
        ts = _auto_seq_tile(S, B, D, itemsize, train=train and dropout_p > 0.0,
                            budget_bytes=budget, granule=granule)
    ts = min(int(ts), S)
    assert ts == S or ts % granule == 0, (
        f"seq tile must be a multiple of {granule} for dtype "
        f"{jnp.dtype(out_dtype).name} (or the full seq_len)")
    _check_tile_fits(2 * ts * (2 * B * D * itemsize + 4 * D), vmem_limit)

    pe = pe_buffer[:S, 0, :].astype(jnp.float32)        # (S, D); kernel computes in f32
    x2 = x.reshape(S, B * D)                            # lane-dense 2-D slab
    seed_arr = jnp.reshape(jnp.asarray(seed, jnp.int32), (1,))

    kernel = functools.partial(
        _pe_add_kernel, batch=B, d_model=D, row_stride=B * D, seq_tile=ts,
        dropout_p=float(dropout_p), train=bool(train))

    extra = {}
    if donate_x:
        # Alias indices count ALL call operands including the scalar-prefetch seed:
        # 0 = seed, 1 = x2, 2 = pe.  Verified by the train-mode check in __main__.
        extra["input_output_aliases"] = {1: 0}

    out2 = pl.pallas_call(
        kernel,
        out_shape=jax.ShapeDtypeStruct((S, B * D), out_dtype),
        grid_spec=pltpu.PrefetchScalarGridSpec(
            num_scalar_prefetch=1,                      # seed lives in SMEM
            grid=(pl.cdiv(S, ts),),
            in_specs=[
                pl.BlockSpec((ts, B * D), lambda i, s: (i, 0)),   # x tile (lane-dense)
                pl.BlockSpec((ts, D), lambda i, s: (i, 0)),       # pe tile
            ],
            out_specs=pl.BlockSpec((ts, B * D), lambda i, s: (i, 0)),
        ),
        compiler_params=pltpu.CompilerParams(
            dimension_semantics=(_seq_dimension_semantics(),),
            vmem_limit_bytes=int(vmem_limit),
        ),
        **extra,
    )(seed_arr, x2, pe)
    return out2.reshape(S, B, D)


def embed_positional_encoding_forward(token_ids, emb_table, pe_buffer, *,
                                      dropout_p: float = 0.1, train: bool = False,
                                      seed: int = 0, ts: int | None = None):
    """Fused SmallLanguageModel front end: posEnc(inputEmb(X)); X is [S, B] int ids."""
    S, B = token_ids.shape
    V, D = emb_table.shape
    max_len = pe_buffer.shape[0]
    assert S <= max_len and pe_buffer.shape[2] == D
    if train:
        assert 0.0 <= dropout_p < 1.0
    assert S * B * D < 2 ** 31

    out_dtype = emb_table.dtype
    itemsize = jnp.dtype(out_dtype).itemsize
    granule = _sublane_granule(itemsize)
    budget, vmem_limit = _vmem_budget_and_limit()

    if ts is None:
        ts = _auto_seq_tile(S, B, D, itemsize, train=train and dropout_p > 0.0,
                            budget_bytes=budget, granule=granule)
    ts = min(int(ts), S)
    assert ts == S or ts % granule == 0
    _check_tile_fits(2 * ts * (B * D * itemsize + 4 * D + 4 * B) + V * D * itemsize,
                     vmem_limit)

    pe = pe_buffer[:S, 0, :].astype(jnp.float32)
    idx = token_ids.astype(jnp.int32)
    seed_arr = jnp.reshape(jnp.asarray(seed, jnp.int32), (1,))

    kernel = functools.partial(
        _embed_pe_kernel, batch=B, d_model=D, vocab=V, row_stride=B * D, seq_tile=ts,
        dropout_p=float(dropout_p), train=bool(train))

    out2 = pl.pallas_call(
        kernel,
        out_shape=jax.ShapeDtypeStruct((S, B * D), out_dtype),
        grid_spec=pltpu.PrefetchScalarGridSpec(
            num_scalar_prefetch=1,
            grid=(pl.cdiv(S, ts),),
            in_specs=[
                pl.BlockSpec((ts, B), lambda i, s: (i, 0)),     # token ids tile
                pl.BlockSpec((V, D), lambda i, s: (0, 0)),      # emb table (VMEM-resident)
                pl.BlockSpec((ts, D), lambda i, s: (i, 0)),     # pe tile
            ],
            out_specs=pl.BlockSpec((ts, B * D), lambda i, s: (i, 0)),
        ),
        compiler_params=pltpu.CompilerParams(
            dimension_semantics=(_seq_dimension_semantics(),),
            vmem_limit_bytes=int(vmem_limit),
        ),
    )(seed_arr, idx, emb_table, pe)
    return out2.reshape(S, B, D)


# ----------------------------------------------------------------------------
# Self-test.
# ----------------------------------------------------------------------------
if __name__ == "__main__":
    seq_len, batch, d_model = 16, 2, 32          # d_model == vocabSize in this model
    vocab_size = d_model

    key = jax.random.PRNGKey(0)
    kx, kt, ke = jax.random.split(key, 3)
    x = jax.random.normal(kx, (seq_len, batch, d_model), dtype=jnp.float32)
    token_ids = jax.random.randint(kt, (seq_len, batch), 0, vocab_size, dtype=jnp.int32)
    emb_table = jax.random.normal(ke, (vocab_size, d_model), dtype=jnp.float32)
    pe_buffer = make_pe_buffer(d_model=d_model, max_len=5000)

    ref_pe = x + pe_buffer[:seq_len]             # eval-mode PositionalEncoding reference

    # 1) PositionalEncoding, eval mode, auto tile (single grid step at this shape).
    out = jax.block_until_ready(positional_encoding_forward(x, pe_buffer, train=False))
    assert out.shape == (seq_len, batch, d_model)
    assert jnp.allclose(out, ref_pe, atol=1e-6, rtol=1e-6), "eval mismatch vs reference"

    # 2) Multi-step grid (explicit small tile) + per-batch pe reuse.
    out_tiled = jax.block_until_ready(
        positional_encoding_forward(x, pe_buffer, train=False, ts=8))
    assert jnp.allclose(out_tiled, ref_pe, atol=1e-6, rtol=1e-6), "tiled eval mismatch"

    # 3) Train mode (inverted dropout), output aliased onto x's HBM buffer.
    p = 0.1
    out_train = jax.block_until_ready(
        positional_encoding_forward(x, pe_buffer, dropout_p=p, train=True, seed=123,
                                    donate_x=True))
    scaled = ref_pe / (1.0 - p)
    kept = jnp.isclose(out_train, scaled, rtol=1e-5, atol=1e-5)
    dropped = out_train == 0.0
    assert bool(jnp.all(kept | dropped)), "dropout output not {0, scaled} valued"
    frac = float(jnp.mean(dropped))
    assert 0.0 < frac < 0.5, f"implausible dropout fraction {frac}"

    # 3b) Dropout mask is tiling-invariant (hash of global element ids).
    out_train_tiled = jax.block_until_ready(
        positional_encoding_forward(x, pe_buffer, dropout_p=p, train=True, seed=123, ts=8))
    assert jnp.allclose(out_train, out_train_tiled, atol=1e-6, rtol=1e-6)

    # 4) Fused Embedding + PositionalEncoding, eval mode.
    ref_emb = emb_table[token_ids] + pe_buffer[:seq_len]
    out_emb = jax.block_until_ready(
        embed_positional_encoding_forward(token_ids, emb_table, pe_buffer, train=False))
    assert out_emb.shape == (seq_len, batch, d_model)
    # Loose tolerance: MXU f32 matmul runs as bf16 passes on real hardware.
    assert jnp.allclose(out_emb, ref_emb, atol=1e-2, rtol=1e-2), "fused eval mismatch"

    # 5) Fused kernel, train mode sanity.
    out_emb_tr = jax.block_until_ready(
        embed_positional_encoding_forward(token_ids, emb_table, pe_buffer,
                                          dropout_p=p, train=True, seed=7))
    scaled_e = ref_emb / (1.0 - p)
    kept_e = jnp.isclose(out_emb_tr, scaled_e, rtol=1e-2, atol=1e-2)
    dropped_e = out_emb_tr == 0.0
    assert bool(jnp.all(kept_e | dropped_e)), "fused dropout output not {0, scaled} valued"

    print("KERNEL_OK")
</pallas_src>

<mosaic_0001>
module attributes {stable_mosaic.version = 11 : i64} {
  func.func @_pe_add_kernel(%arg0: i32, %arg1: memref<1xi32, #tpu.memory_space<smem>>, %arg2: memref<16x64xf32, #tpu.memory_space<vmem>>, %arg3: memref<16x32xf32, #tpu.memory_space<vmem>>, %arg4: memref<16x64xf32, #tpu.memory_space<vmem>>) attributes {dimension_semantics = [#tpu.dimension_semantics<parallel>], iteration_bounds = array<i64: 1>, scalar_prefetch = 1 : i64, scratch_operands = 0 : i64, tpu.core_type = #tpu.core_type<tc>, window_params = [{transform_indices = @transform_0, window_bounds = array<i64: 16, 64>}, {transform_indices = @transform_1, window_bounds = array<i64: 16, 32>}, {transform_indices = @transform_2, window_bounds = array<i64: 16, 64>}]} {
    %c0 = arith.constant 0 : index
    %c0_0 = arith.constant 0 : index
    %0 = vector.load %arg3[%c0, %c0_0] : memref<16x32xf32, #tpu.memory_space<vmem>>, vector<16x32xf32>
    %c0_1 = arith.constant 0 : index
    %c0_2 = arith.constant 0 : index
    %1 = vector.load %arg2[%c0_1, %c0_2] : memref<16x64xf32, #tpu.memory_space<vmem>>, vector<16x32xf32>
    %2 = arith.addf %1, %0 : vector<16x32xf32>
    %c0_3 = arith.constant 0 : index
    %c0_4 = arith.constant 0 : index
    %3 = vector.load %arg4[%c0_3, %c0_4] : memref<16x64xf32, #tpu.memory_space<vmem>>, vector<16x32xf32>
    tpu.vector_store %arg4[%c0_3, %c0_4], %2 {strides = array<i32>} : memref<16x64xf32, #tpu.memory_space<vmem>>, vector<16x32xf32>,
    %c0_5 = arith.constant 0 : index
    %c32 = arith.constant 32 : index
    %4 = vector.load %arg2[%c0_5, %c32] : memref<16x64xf32, #tpu.memory_space<vmem>>, vector<16x32xf32>
    %5 = arith.addf %4, %0 : vector<16x32xf32>
    %c0_6 = arith.constant 0 : index
    %c32_7 = arith.constant 32 : index
    %6 = vector.load %arg4[%c0_6, %c32_7] : memref<16x64xf32, #tpu.memory_space<vmem>>, vector<16x32xf32>
    tpu.vector_store %arg4[%c0_6, %c32_7], %5 {strides = array<i32>} : memref<16x64xf32, #tpu.memory_space<vmem>>, vector<16x32xf32>,
    return
  }
  func.func @transform_0(%arg0: i32, %arg1: memref<1xi32, #tpu.memory_space<smem>>) -> (i32, i32) {
    %c0_i32 = arith.constant 0 : i32
    %c0_i32_0 = arith.constant 0 : i32
    return %arg0, %c0_i32 : i32, i32
  }
  func.func @transform_1(%arg0: i32, %arg1: memref<1xi32, #tpu.memory_space<smem>>) -> (i32, i32) {
    %c0_i32 = arith.constant 0 : i32
    %c0_i32_0 = arith.constant 0 : i32
    return %arg0, %c0_i32 : i32, i32
  }
  func.func @transform_2(%arg0: i32, %arg1: memref<1xi32, #tpu.memory_space<smem>>) -> (i32, i32) {
    %c0_i32 = arith.constant 0 : i32
    %c0_i32_0 = arith.constant 0 : i32
    return %arg0, %c0_i32 : i32, i32
  }
}

</mosaic_0001>

<llo_original>
// kernel: tpu_custom_call.1
$region0: #{tpu_custom_call.1}
  #allocation0 [shape = 'u32[]', space=smem, size = 0x4, offset = 0x4, fixed_abs, tag = 'smem constant byte address 0x4 - core index']
  #allocation1 [shape = 'u32[144,128]{1,0:T(1,128)}', space=vmem, size = 0x12000, scoped, tag = 'internal scratch']
  #allocation2 [shape = 's32[1]{0}', space=sflag, size = 0x4, scoped, tag = 'scoped memory for tpu_custom_call.1']
  #allocation3 [shape = 's32[1]{0:T(128)S(6)}', space=smem, size = 0x200, scoped, tag = 'prefetched SMEM operand 0']
  %s0 = inlined_call_operand.<no memory space> [shape: s32[1], index: 0, kind: input, shape index: {}]
  %s1 = inlined_call_operand.hbm [shape: f32[16,64], index: 1, kind: input, shape index: {}]
  %s2 = inlined_call_operand.hbm [shape: f32[16,32], index: 2, kind: input, shape index: {}]
  %s3 = inlined_call_operand.hbm [shape: f32[16,64], index: 3, kind: output, shape index: {}]
  %s4 = sld [smem:[#allocation0]]
  $region26: #{tpu_custom_call.1} parent=0
    _
  %s6 = ssub.s32 1, %s4
  %s7 = scalar_select 0, %s6, %s4
  %8 = sst [smem:[#allocation3]] %s0
  $region1: #{tpu_custom_call.1} parent=0
    #allocation4 [shape = 'u8[8192]{0}', space=vmem, size = 0x2000, scoped, tag = 'input window, operand 1, single buffered']
    #allocation5 [shape = 's32[1]{0}', space=sflag, size = 0x4, scoped, tag = 'scoped memory for tpu_custom_call.1']
    #allocation6 [shape = 's32[1]{0}', space=sflag, size = 0x4, scoped, tag = 'scoped memory for tpu_custom_call.1']
    #allocation7 [shape = 'u8[8192]{0}', space=vmem, size = 0x2000, scoped, tag = 'input window, operand 2, single buffered']
    #allocation8 [shape = 's32[1]{0}', space=sflag, size = 0x4, scoped, tag = 'scoped memory for tpu_custom_call.1']
    #allocation9 [shape = 'u8[8192]{0}', space=vmem, size = 0x2000, scoped, tag = 'output window, operand 0, single buffered']
    %9 = vsyncpa [#allocation5], 0
    %10 = vsyncpa [#allocation8], 0
    %11 = vsyncpa [#allocation6], 0
    // Predicated region
    $region2: #{tpu_custom_call.1} parent=1 // pred_check
      _
    $region3: #{tpu_custom_call.1} parent=1 // pred_check_branch
      %13 = sbr.rel (0) target = $region5
    $region4: #{tpu_custom_call.1} parent=1 // pred_region
      %s15 = ssub.s32 256, 256
      %16 = vsyncadd [#allocation5], %s15
      %s17 = sshll.u32 [#allocation4], 4
      %s18 = int_to_ptr.vmem [resolvable:$true] %s17
      %23 = dma.hbm_to_vmem [thread:$0]  %s1, 256, %s18, [#allocation5], 128, 128, 8
    $region5: #{tpu_custom_call.1} parent=1 // pred_fallthru
      _
    // Predicated region
    $region6: #{tpu_custom_call.1} parent=1 // pred_check
      _
    $region7: #{tpu_custom_call.1} parent=1 // pred_check_branch
      %25 = sbr.rel (0) target = $region9
    $region8: #{tpu_custom_call.1} parent=1 // pred_region
      %s27 = ssub.s32 256, 256
      %28 = vsyncadd [#allocation8], %s27
      %s29 = sshll.u32 [#allocation7], 4
      %s30 = int_to_ptr.vmem [resolvable:$true] %s29
      %35 = dma.hbm_to_vmem [thread:$0]  %s2, 256, %s30, [#allocation8], 128, 128, 8
    $region9: #{tpu_custom_call.1} parent=1 // pred_fallthru
      _
    // Predicated region
    $region10: #{tpu_custom_call.1} parent=1 // pred_check
      _
    $region11: #{tpu_custom_call.1} parent=1 // pred_check_branch
      %37 = sbr.rel (0) target = $region13
    $region12: #{tpu_custom_call.1} parent=1 // pred_region
      %38 = dma.done [#allocation5], 256
    $region13: #{tpu_custom_call.1} parent=1 // pred_fallthru
      _
    // Predicated region
    $region14: #{tpu_custom_call.1} parent=1 // pred_check
      _
    $region15: #{tpu_custom_call.1} parent=1 // pred_check_branch
      %40 = sbr.rel (0) target = $region17
    $region16: #{tpu_custom_call.1} parent=1 // pred_region
      %41 = dma.done [#allocation8], 256
    $region17: #{tpu_custom_call.1} parent=1 // pred_fallthru
      _
    %v42 = vld [vmem:[#allocation7] sm:$0xff]
    %v43 = vld [vmem:[#allocation7 + $0x8] sm:$0xff]
    %v44 = vld [vmem:[#allocation4] sm:$0xff]
    %v45 = vld [vmem:[#allocation4 + $0x8] sm:$0xff]
    %v46 = vadd.f32 %v44, %v42
    %v47 = vadd.f32 %v45, %v43
    %vm48 = vcmask 261120
    %49 = vst.msk [vmem:[#allocation9] sm:$0xff] %vm48, %v46
    %50 = vst.msk [vmem:[#allocation9 + $0x8] sm:$0xff] %vm48, %v47
    %v51 = vld [vmem:[#allocation4] sm:$0xff]
    %v52 = vld [vmem:[#allocation4 + $0x8] sm:$0xff]
    %55 = vrot.lane.b32.xlu0 %v42, 32
    %v56 = vpop.permute.xlu0 %55
    %57 = vrot.lane.b32.xlu0 %v43, 32
    %v58 = vpop.permute.xlu0 %57
    %v61 = vadd.f32 %v51, %v56
    %v62 = vadd.f32 %v52, %v58
    %vm63 = vcmask 523520
    %64 = vst.msk [vmem:[#allocation9] sm:$0xff] %vm63, %v61
    %65 = vst.msk [vmem:[#allocation9 + $0x8] sm:$0xff] %vm63, %v62
    // Predicated region
    $region18: #{tpu_custom_call.1} parent=1 // pred_check
      _
    $region19: #{tpu_custom_call.1} parent=1 // pred_check_branch
      %67 = sbr.rel (0) target = $region21
    $region20: #{tpu_custom_call.1} parent=1 // pred_region
      %s69 = ssub.s32 256, 256
      %70 = vsyncadd [#allocation6], %s69
      %s71 = sshll.u32 [#allocation9], 4
      %s72 = int_to_ptr.vmem [resolvable:$true] %s71
      %77 = dma.vmem_to_hbm [thread:$0]  %s72, 256, %s3, [#allocation6], 128, 128, 8
    $region21: #{tpu_custom_call.1} parent=1 // pred_fallthru
      _
    // Predicated region
    $region22: #{tpu_custom_call.1} parent=1 // pred_check
      _
    $region23: #{tpu_custom_call.1} parent=1 // pred_check_branch
      %79 = sbr.rel (0) target = $region25
    $region24: #{tpu_custom_call.1} parent=1 // pred_region
      %80 = dma.done [#allocation6], 256
    $region25: #{tpu_custom_call.1} parent=1 // pred_fallthru
      _
    %81 = vsyncpa [#allocation5], 1
    %82 = vsyncpa [#allocation8], 1
    %83 = vsyncpa [#allocation6], 1

</llo_original>
